<compile_context>
chip_gen: v5e
topology: v5e:2x2
jax: 0.10.0
libtpu: 0.0.40
codegen_flags: <defaults>
</compile_context>

<pallas_src>
import functools

import jax
import jax.numpy as jnp
from jax.experimental import pallas as pl
from jax.experimental.pallas import tpu as pltpu


def _locked_dropout_kernel(x_ref, m_ref, o_ref):
    # x_ref: (TILE_T, BH) streamed block of the input.
    # m_ref: (1, BH) pre-scaled mask (values are 0 or 1/keep_prob); constant
    #        index_map keeps it VMEM resident for the whole grid.
    o_ref[...] = x_ref[...] * m_ref[...]


@functools.partial(jax.jit, static_argnames=("dropout", "training"))
def _locked_dropout_impl(x, seed, *, dropout, training):
    T, B, H = x.shape
    BH = B * H
    keep_prob = 1.0 - float(dropout)
    itemsize = jnp.dtype(x.dtype).itemsize

    # One mask per (batch, hidden) position, shared ("locked") across T.
    # Pre-scale by 1/keep_prob and keep it in x.dtype so the kernel inner
    # loop is a single multiply with no per-element conversions.
    key = jax.random.PRNGKey(seed)
    keep = jax.random.bernoulli(key, p=keep_prob, shape=(1, BH))
    mask2d = keep.astype(x.dtype) * jnp.asarray(1.0 / keep_prob, dtype=x.dtype)

    x2d = x.reshape(T, BH)

    # Tile the time axis: aim for ~2 MiB input blocks (measured tiled
    # elementwise kernels hit ~85%+ of HBM roofline there) while respecting
    # the (8, 128) sublane constraint (TILE_T must be a multiple of 8 or the
    # full T).  The lane dim is the full BH, so it is always legal.
    target_bytes = 2 * 1024 * 1024
    tile_t = max(1, target_bytes // (BH * itemsize))
    if tile_t >= T:
        tile_t = T                       # full axis -> always a legal block dim
    else:
        tile_t = max(8, (tile_t // 8) * 8)
    num_blocks = pl.cdiv(T, tile_t)

    cost = pl.CostEstimate(
        flops=T * BH,
        transcendentals=0,
        bytes_accessed=(2 * T * BH + BH) * itemsize,
    )

    out2d = pl.pallas_call(
        _locked_dropout_kernel,
        grid=(num_blocks,),
        in_specs=[
            pl.BlockSpec((tile_t, BH), lambda t: (t, 0)),   # streamed input
            pl.BlockSpec((1, BH), lambda t: (0, 0)),        # VMEM-resident mask
        ],
        out_specs=pl.BlockSpec((tile_t, BH), lambda t: (t, 0)),
        out_shape=jax.ShapeDtypeStruct((T, BH), x.dtype),
        compiler_params=pltpu.CompilerParams(
            dimension_semantics=("parallel",),
        ),
        cost_estimate=cost,
    )(x2d, mask2d)

    return out2d.reshape(T, B, H)


def locked_dropout(x, *, seed=0, dropout=0.2, training=True):
    """Pallas implementation of LockedDropout.forward(x, dropout)."""
    if (not training) or dropout == 0.0:
        return x
    return _locked_dropout_impl(x, jnp.int32(seed), dropout=float(dropout),
                                training=True)


if __name__ == "__main__":
    key = jax.random.PRNGKey(0)
    T, B, H = 8, 4, 32                    # (seq, batch, hidden)
    x = jax.random.normal(key, (T, B, H), dtype=jnp.float32)

    out = locked_dropout(x, seed=0, dropout=0.2, training=True)
    out = jax.block_until_ready(out)

    # Light sanity checks of locked-dropout semantics.
    ratio = jnp.where(jnp.abs(x) > 1e-6, out / x, 0.0)
    # Mask values are either 0 or 1/(1-p).
    valid_vals = jnp.all(
        (jnp.abs(ratio) < 1e-6) | (jnp.abs(ratio - 1.0 / 0.8) < 1e-4)
    )
    # Mask is identical ("locked") across the time axis.
    locked = jnp.allclose(ratio, ratio[0:1], atol=1e-5)
    # Eval mode is the identity.
    same = jnp.array_equal(locked_dropout(x, dropout=0.2, training=False), x)

    assert bool(valid_vals) and bool(locked) and bool(same)
    print("KERNEL_OK")
</pallas_src>

<mosaic_0001>
module attributes {stable_mosaic.version = 11 : i64} {
  func.func @_locked_dropout_kernel(%arg0: i32, %arg1: memref<8x128xf32, #tpu.memory_space<vmem>>, %arg2: memref<1x128xf32, #tpu.memory_space<vmem>>, %arg3: memref<8x128xf32, #tpu.memory_space<vmem>>) attributes {dimension_semantics = [#tpu.dimension_semantics<parallel>], iteration_bounds = array<i64: 1>, scalar_prefetch = 0 : i64, scratch_operands = 0 : i64, tpu.core_type = #tpu.core_type<tc>, window_params = [{transform_indices = @transform_0, window_bounds = array<i64: 8, 128>}, {pipeline_mode = #tpu.pipeline_mode<synchronous>, transform_indices = @transform_1, window_bounds = array<i64: 1, 128>}, {transform_indices = @transform_2, window_bounds = array<i64: 8, 128>}]} {
    %c0 = arith.constant 0 : index
    %c0_0 = arith.constant 0 : index
    %0 = vector.load %arg1[%c0, %c0_0] : memref<8x128xf32, #tpu.memory_space<vmem>>, vector<8x128xf32>
    %c0_1 = arith.constant 0 : index
    %c0_2 = arith.constant 0 : index
    %1 = vector.load %arg2[%c0_1, %c0_2] : memref<1x128xf32, #tpu.memory_space<vmem>>, vector<1x128xf32>
    %2 = vector.broadcast %1 : vector<1x128xf32> to vector<8x128xf32>
    %3 = arith.mulf %0, %2 : vector<8x128xf32>
    %c0_3 = arith.constant 0 : index
    %c0_4 = arith.constant 0 : index
    %4 = vector.load %arg3[%c0_3, %c0_4] : memref<8x128xf32, #tpu.memory_space<vmem>>, vector<8x128xf32>
    tpu.vector_store %arg3[%c0_3, %c0_4], %3 {strides = array<i32>} : memref<8x128xf32, #tpu.memory_space<vmem>>, vector<8x128xf32>,
    return
  }
  func.func @transform_0(%arg0: i32) -> (i32, i32) {
    %c0_i32 = arith.constant 0 : i32
    %c0_i32_0 = arith.constant 0 : i32
    return %arg0, %c0_i32 : i32, i32
  }
  func.func @transform_1(%arg0: i32) -> (i32, i32) {
    %c0_i32 = arith.constant 0 : i32
    %c0_i32_0 = arith.constant 0 : i32
    %c0_i32_1 = arith.constant 0 : i32
    return %c0_i32, %c0_i32_0 : i32, i32
  }
  func.func @transform_2(%arg0: i32) -> (i32, i32) {
    %c0_i32 = arith.constant 0 : i32
    %c0_i32_0 = arith.constant 0 : i32
    return %arg0, %c0_i32 : i32, i32
  }
}

</mosaic_0001>

<llo_original>
// kernel: _locked_dropout_impl.1
$region0: #{_locked_dropout_impl.1}
  #allocation0 [shape = 'u32[]', space=smem, size = 0x4, offset = 0x4, fixed_abs, tag = 'smem constant byte address 0x4 - core index']
  #allocation1 [shape = 'u32[72,128]{1,0:T(1,128)}', space=vmem, size = 0x9000, scoped, tag = 'internal scratch']
  %s0 = inlined_call_operand.vmem [shape: f32[8,128], index: 0, kind: input, shape index: {}]
  %s1 = inlined_call_operand.vmem [shape: f32[1,128], index: 1, kind: input, shape index: {}]
  %s2 = inlined_call_operand.vmem [shape: f32[8,128], index: 2, kind: output, shape index: {}]
  %s3 = sld [smem:[#allocation0]]
  $region18: #{_locked_dropout_impl.1} parent=0
    _
  %s5 = ssub.s32 1, %s3
  %s6 = scalar_select 0, %s5, %s3
  // Predicated region
  $region2: #{_locked_dropout_impl.1} parent=0 // pred_check
    _
  $region3: #{_locked_dropout_impl.1} parent=0 // pred_check_branch
    %8 = sbr.rel (0) target = $region5
  $region4: #{_locked_dropout_impl.1} parent=0 // pred_region
    _
  $region5: #{_locked_dropout_impl.1} parent=0 // pred_fallthru
    _
  // Predicated region
  $region6: #{_locked_dropout_impl.1} parent=0 // pred_check
    _
  $region7: #{_locked_dropout_impl.1} parent=0 // pred_check_branch
    %10 = sbr.rel (0) target = $region9
  $region8: #{_locked_dropout_impl.1} parent=0 // pred_region
    _
  $region9: #{_locked_dropout_impl.1} parent=0 // pred_fallthru
    _
  %v11 = vld [vmem:[%s0] sm:$0xff]
  %v12 = vld [vmem:[%s1] sm:$0x1]
  %v14 = vperm.slane %v12, 0
  %v16 = vmul.f32 %v11, %v14
  %17 = vst [vmem:[%s2] sm:$0xff] %v16
  // Predicated region
  $region10: #{_locked_dropout_impl.1} parent=0 // pred_check
    _
  $region11: #{_locked_dropout_impl.1} parent=0 // pred_check_branch
    %19 = sbr.rel (0) target = $region13
  $region12: #{_locked_dropout_impl.1} parent=0 // pred_region
    _
  $region13: #{_locked_dropout_impl.1} parent=0 // pred_fallthru
    _
  // Predicated region
  $region14: #{_locked_dropout_impl.1} parent=0 // pred_check
    _
  $region15: #{_locked_dropout_impl.1} parent=0 // pred_check_branch
    %21 = sbr.rel (0) target = $region17
  $region16: #{_locked_dropout_impl.1} parent=0 // pred_region
    _
  $region17: #{_locked_dropout_impl.1} parent=0 // pred_fallthru
    _

</llo_original>
